<compile_context>
chip_gen: v7x
topology: tpu7x:2x2x1
jax: 0.10.0
libtpu: 0.0.40
codegen_flags: <defaults>
</compile_context>

<pallas_src>
import jax
import jax.numpy as jnp
from jax.experimental import pallas as pl
from jax.experimental.pallas import tpu as pltpu


def _normalize_kernel(scale_ref, bias_ref, x_ref, o_ref):
    # Grid = (b, c[, row_tiles]); channel index selects per-channel scalars
    # from SMEM (scalar prefetch) on the free scalar path.
    ch = pl.program_id(1)
    s = scale_ref[ch]
    bia = bias_ref[ch]
    o_ref[...] = (x_ref[...] * s + bia).astype(o_ref.dtype)


def _choose_lane_layout(spatial):
    """Pick (rows, lanes) with lanes a multiple of 128 and rows*lanes == spatial."""
    for lanes in (1024, 512, 256, 128):
        if spatial % lanes == 0:
            return spatial // lanes, lanes
    return None


def _choose_row_tile(rows, lanes, itemsize, target_bytes=2 * 1024 * 1024):
    """Largest row tile dividing `rows`, 8-sublane aligned, <= target block bytes."""
    max_rows = max(1, target_bytes // (lanes * itemsize))
    if rows <= max_rows:
        return rows                      # whole slab; full-extent block is always legal
    best = None
    r = 8
    while r <= max_rows:
        if rows % r == 0:
            best = r
        r += 8
    return best if best is not None else rows


def input_normalize(features, mean, std):
    """features: (b, c, t, j, n); mean/std: length-c sequences."""
    b, c, t, j, n = features.shape
    scale = 1.0 / jnp.asarray(std, dtype=jnp.float32)
    bias = -jnp.asarray(mean, dtype=jnp.float32) * scale

    spatial = t * j * n
    itemsize = jnp.dtype(features.dtype).itemsize
    layout = _choose_lane_layout(spatial)

    if layout is not None:
        rows, lanes = layout
        row_tile = _choose_row_tile(rows, lanes, itemsize)
        n_row_tiles = rows // row_tile
        x = features.reshape(b, c, rows, lanes)

        grid_spec = pltpu.PrefetchScalarGridSpec(
            num_scalar_prefetch=2,                       # scale, bias -> SMEM
            grid=(b, c, n_row_tiles),
            in_specs=[
                pl.BlockSpec((1, 1, row_tile, lanes),
                             lambda bi, ci, ri, s_r, b_r: (bi, ci, ri, 0)),
            ],
            out_specs=pl.BlockSpec((1, 1, row_tile, lanes),
                                   lambda bi, ci, ri, s_r, b_r: (bi, ci, ri, 0)),
        )
        dims = ("parallel", "parallel", "parallel")
        out_shape = jax.ShapeDtypeStruct((b, c, rows, lanes), features.dtype)
    else:
        # Fallback: t*j*n not a multiple of 128 -> full-extent (t, j*n) block.
        # TODO(synk): pad j*n to a multiple of 128 in the wrapper if masked
        # sub-128-lane stores ever show up as the bottleneck for odd shapes.
        x = features.reshape(b, c, t, j * n)
        grid_spec = pltpu.PrefetchScalarGridSpec(
            num_scalar_prefetch=2,
            grid=(b, c),
            in_specs=[
                pl.BlockSpec((1, 1, t, j * n),
                             lambda bi, ci, s_r, b_r: (bi, ci, 0, 0)),
            ],
            out_specs=pl.BlockSpec((1, 1, t, j * n),
                                   lambda bi, ci, s_r, b_r: (bi, ci, 0, 0)),
        )
        dims = ("parallel", "parallel")
        out_shape = jax.ShapeDtypeStruct((b, c, t, j * n), features.dtype)

    out = pl.pallas_call(
        _normalize_kernel,
        out_shape=out_shape,
        grid_spec=grid_spec,
        compiler_params=pltpu.CompilerParams(dimension_semantics=dims),
    )(scale, bias, x)

    return out.reshape(b, c, t, j, n)


if __name__ == "__main__":
    # Small deterministic example consistent with the module (c must be 3
    # because mean/std have 3 entries).
    b, c, t, j, n = 2, 3, 8, 16, 16
    key = jax.random.PRNGKey(0)
    x = jax.random.normal(key, (b, c, t, j, n), dtype=jnp.float32)

    mean = [-0.0206, -1.9192, -0.1158]
    std = [0.1593, 0.3789, 0.2708]

    out = input_normalize(x, mean, std)
    out = jax.block_until_ready(out)

    # Pure-JAX reference of the PyTorch forward.
    mean_a = jnp.asarray(mean, jnp.float32).reshape(1, c, 1, 1, 1)
    std_a = jnp.asarray(std, jnp.float32).reshape(1, c, 1, 1, 1)
    ref = (x - mean_a) / std_a

    assert out.shape == x.shape
    assert out.dtype == x.dtype
    assert jnp.allclose(out, ref, rtol=1e-5, atol=1e-5)

    print("KERNEL_OK")
</pallas_src>

<mosaic_0001>
module attributes {stable_mosaic.version = 11 : i64} {
  func.func @_normalize_kernel(%arg0: i32, %arg1: i32, %arg2: i32, %arg3: memref<3xf32, #tpu.memory_space<smem>>, %arg4: memref<3xf32, #tpu.memory_space<smem>>, %arg5: memref<1x1x2x1024xf32, #tpu.memory_space<vmem>>, %arg6: memref<1x1x2x1024xf32, #tpu.memory_space<vmem>>) attributes {dimension_semantics = [#tpu.dimension_semantics<parallel>, #tpu.dimension_semantics<parallel>, #tpu.dimension_semantics<parallel>], iteration_bounds = array<i64: 2, 3, 1>, scalar_prefetch = 2 : i64, scratch_operands = 0 : i64, tpu.core_type = #tpu.core_type<tc>, window_params = [{transform_indices = @transform_0, window_bounds = array<i64: 1, 1, 2, 1024>}, {transform_indices = @transform_1, window_bounds = array<i64: 1, 1, 2, 1024>}]} {
    %0 = arith.index_cast %arg1 : i32 to index
    %1 = memref.load %arg3[%0] : memref<3xf32, #tpu.memory_space<smem>>
    %2 = arith.index_cast %arg1 : i32 to index
    %3 = memref.load %arg4[%2] : memref<3xf32, #tpu.memory_space<smem>>
    %c0 = arith.constant 0 : index
    %c0_0 = arith.constant 0 : index
    %c0_1 = arith.constant 0 : index
    %c0_2 = arith.constant 0 : index
    %4 = vector.load %arg5[%c0, %c0_0, %c0_1, %c0_2] : memref<1x1x2x1024xf32, #tpu.memory_space<vmem>>, vector<1x1x2x1024xf32>
    %5 = vector.broadcast %1 : f32 to vector<1x1x2x1024xf32>
    %6 = arith.mulf %4, %5 : vector<1x1x2x1024xf32>
    %7 = vector.broadcast %3 : f32 to vector<1x1x2x1024xf32>
    %8 = arith.addf %6, %7 : vector<1x1x2x1024xf32>
    %c0_3 = arith.constant 0 : index
    %c0_4 = arith.constant 0 : index
    %c0_5 = arith.constant 0 : index
    %c0_6 = arith.constant 0 : index
    %9 = vector.load %arg6[%c0_3, %c0_4, %c0_5, %c0_6] : memref<1x1x2x1024xf32, #tpu.memory_space<vmem>>, vector<1x1x2x1024xf32>
    tpu.vector_store %arg6[%c0_3, %c0_4, %c0_5, %c0_6], %8 {strides = array<i32>} : memref<1x1x2x1024xf32, #tpu.memory_space<vmem>>, vector<1x1x2x1024xf32>,
    return
  }
  func.func @transform_0(%arg0: i32, %arg1: i32, %arg2: i32, %arg3: memref<3xf32, #tpu.memory_space<smem>>, %arg4: memref<3xf32, #tpu.memory_space<smem>>) -> (i32, i32, i32, i32) {
    %c0_i32 = arith.constant 0 : i32
    %c0_i32_0 = arith.constant 0 : i32
    return %arg0, %arg1, %arg2, %c0_i32 : i32, i32, i32, i32
  }
  func.func @transform_1(%arg0: i32, %arg1: i32, %arg2: i32, %arg3: memref<3xf32, #tpu.memory_space<smem>>, %arg4: memref<3xf32, #tpu.memory_space<smem>>) -> (i32, i32, i32, i32) {
    %c0_i32 = arith.constant 0 : i32
    %c0_i32_0 = arith.constant 0 : i32
    return %arg0, %arg1, %arg2, %c0_i32 : i32, i32, i32, i32
  }
}

</mosaic_0001>

<llo_original>
// kernel: tpu_custom_call.1
$region0: #{tpu_custom_call.1}
  #allocation0 [shape = 'u32[]', space=smem, size = 0x4, offset = 0x4, fixed_abs, tag = 'smem constant byte address 0x4 - core index']
  #allocation1 [shape = 'u32[144,128]{1,0:T(1,128)}', space=vmem, size = 0x12000, scoped, tag = 'internal scratch']
  #allocation2 [shape = 's32[1]{0}', space=sflag, size = 0x4, scoped, tag = 'scoped memory for tpu_custom_call.1']
  #allocation3 [shape = 'u8[512]{0}', space=smem, size = 0x200, scoped, tag = 'prefetched SMEM operand 0']
  #allocation4 [shape = 'u8[512]{0}', space=smem, size = 0x200, scoped, tag = 'prefetched SMEM operand 1']
  %s0 = inlined_call_operand.hbm [shape: f32[3], index: 0, kind: input, shape index: {}]
  %s1 = inlined_call_operand.vmem [shape: f32[3], index: 1, kind: input, shape index: {}]
  %s2 = inlined_call_operand.hbm [shape: f32[2,3,2,1024], index: 2, kind: input, shape index: {}]
  %s3 = inlined_call_operand.hbm [shape: f32[2,3,2,1024], index: 3, kind: output, shape index: {}]
  %s4 = sld [smem:[#allocation0]]
  $region41: #{tpu_custom_call.1} parent=0
    _
  %s6 = ssub.s32 1, %s4
  %s7 = scalar_select 0, %s6, %s4
  %9 = dma.hbm_to_smem %s0, 16, [#allocation3], [#allocation2]
  %s10 = sshll.u32 %s1, 4
  %s11 = int_to_ptr.vmem [resolvable:$true] %s10
  %13 = dma.vmem_to_smem %s11, 16, [#allocation4], [#allocation2]
  %14 = dma.done [#allocation2], 32
  %15 = sfence
  $region1: #{tpu_custom_call.1} parent=0
    #allocation5 [shape = 'u8[16384]{0}', space=vmem, size = 0x4000, scoped, tag = 'input window, operand 2']
    #allocation6 [shape = 's32[2]{0}', space=sflag, size = 0x8, scoped, tag = 'scoped memory for tpu_custom_call.1']
    #allocation7 [shape = 's32[2]{0}', space=sflag, size = 0x8, scoped, tag = 'scoped memory for tpu_custom_call.1']
    #allocation8 [shape = 'u8[16384]{0}', space=vmem, size = 0x4000, scoped, tag = 'output window, operand 0']
    %16 = vsyncpa [#allocation6], 0
    %s17 = scalar_lea.sflag [#allocation6], 1
    %18 = vsyncpa %s17, 0
    %19 = vsyncpa [#allocation7], 0
    %s20 = scalar_lea.sflag [#allocation7], 1
    %21 = vsyncpa %s20, 0
    loop: start=0, step=1, limit=8
    $region2: #{tpu_custom_call.1} parent=1 // loop_pre_header
      _
    $region3: #{tpu_custom_call.1} parent=1 // loop_header
      %s23 = sphi 0, %s27
      %p24 = scmp.ge.s32.totalorder %s23, 8
      %s30 = sphi 0, %s49
      %s31 = sphi 0, %s45
      %s32 = sphi 0, %s41
      %s33 = sphi 0, %s30
      %s34 = sphi 0, %s31
      %s35 = sphi 0, %s32
      %s36 = sphi 0, %s33
      %s37 = sphi 0, %s34
      %s38 = sphi 0, %s35
      %s56 = sphi 0, %s58
      %s59 = sphi 0, %s56
      %s60 = sphi 0, %s59
      %s76 = sphi 0, %s60
      %s86 = sphi 0, %s88
      %s89 = sphi 0, %s86
      %s90 = sphi 0, %s89
      %s106 = sphi 0, %s90
    $region4: #{tpu_custom_call.1} parent=1 // loop_header_branch
      %26 = sbr.rel (%p24) target = $region8
    $region5: #{tpu_custom_call.1} parent=1 // loop_body
      %s28 = ssub.s32 %s23, 1
      %s29 = ssub.s32 %s23, 2
      %s39 = sadd.s32 1, %s32
      %p40 = scmp.ge.s32.totalorder %s39, 1
      %s41 = scalar_select %p40, 0, %s39
      %s42 = sadd.s32 1, %s31
      %s43 = scalar_select %p40, %s42, %s31
      %p44 = scmp.ge.s32.totalorder %s43, 3
      %s45 = scalar_select %p44, 0, %s43
      %s46 = sadd.s32 1, %s30
      %s47 = scalar_select %p44, %s46, %s30
      %p48 = scmp.ge.s32.totalorder %s47, 2
      %s49 = scalar_select %p48, 0, %s47
      %s50 = ssub.s32 %s30, %s49
      %s51 = ssub.s32 %s31, %s45
      %s52 = sor.u32 %s50, %s51
      %s53 = ssub.s32 %s32, %s41
      %s54 = sor.u32 %s52, %s53
      %p55 = scmp.eq.s32.totalorder %s54, 0
      %s57 = sadd.s32 %s56, 1
      %s58 = scalar_select %p55, %s56, %s57
      %p61 = pneg %p55
      %p62 = scmp.eq.s32.totalorder %s23, 5
      %p63 = por %p61, %p62
      %p64 = scmp.ne.s32.totalorder %s56, %s59
      %p65 = scmp.eq.s32.totalorder %s23, 0
      %p66 = por %p64, %p65
      %p67 = scmp.ne.s32.totalorder %s56, %s59
      %p68 = scmp.eq.s32.totalorder %s28, 5
      %p69 = por %p67, %p68
      %p70 = scmp.ne.s32.totalorder %s59, %s60
      %p71 = scmp.eq.s32.totalorder %s28, 0
      %p72 = por %p70, %p71
      %p73 = scmp.ne.s32.totalorder %s59, %s60
      %p74 = scmp.eq.s32.totalorder %s29, 5
      %p75 = por %p73, %p74
      %p77 = scmp.ne.s32.totalorder %s60, %s76
      %p78 = scmp.eq.s32.totalorder %s29, 0
      %p79 = por %p77, %p78
      %s80 = ssub.s32 %s30, %s49
      %s81 = ssub.s32 %s31, %s45
      %s82 = sor.u32 %s80, %s81
      %s83 = ssub.s32 %s32, %s41
      %s84 = sor.u32 %s82, %s83
      %p85 = scmp.eq.s32.totalorder %s84, 0
      %s87 = sadd.s32 %s86, 1
      %s88 = scalar_select %p85, %s86, %s87
      %p91 = pneg %p85
      %p92 = scmp.eq.s32.totalorder %s23, 5
      %p93 = por %p91, %p92
      %p94 = scmp.ne.s32.totalorder %s86, %s89
      %p95 = scmp.eq.s32.totalorder %s23, 0
      %p96 = por %p94, %p95
      %p97 = scmp.ne.s32.totalorder %s86, %s89
      %p98 = scmp.eq.s32.totalorder %s28, 5
      %p99 = por %p97, %p98
      %p100 = scmp.ne.s32.totalorder %s89, %s90
      %p101 = scmp.eq.s32.totalorder %s28, 0
      %p102 = por %p100, %p101
      %p103 = scmp.ne.s32.totalorder %s89, %s90
      %p104 = scmp.eq.s32.totalorder %s29, 5
      %p105 = por %p103, %p104
      %p107 = scmp.ne.s32.totalorder %s90, %s106
      %p108 = scmp.eq.s32.totalorder %s29, 0
      %p109 = por %p107, %p108
      %p110 = scmp.le.s32.totalorder 1, %s23
      %p111 = scmp.lt.s32.totalorder %s23, 7
      %p112 = pnand %p110, %p111
      %p113 = pneg %p112
      // Predicated region
      $region9: #{tpu_custom_call.1} parent=5 // pred_check
        _
      $region10: #{tpu_custom_call.1} parent=5 // pred_check_branch
        %115 = sbr.rel (%p112) target = $region12
      $region11: #{tpu_custom_call.1} parent=5 // pred_region
        %s116 = ssub.s32 %s23, 1
      $region12: #{tpu_custom_call.1} parent=5 // pred_fallthru
        _
      %p117 = scmp.lt.s32.totalorder %s23, 6
      // Predicated region
      $region13: #{tpu_custom_call.1} parent=5 // pred_check
        %p118 = pneg %p117
      $region14: #{tpu_custom_call.1} parent=5 // pred_check_branch
        %120 = sbr.rel (%p118) target = $region16
      $region15: #{tpu_custom_call.1} parent=5 // pred_region
        // Predicated region
        $region17: #{tpu_custom_call.1} parent=15 // pred_check
          %p121 = pneg %p66
        $region18: #{tpu_custom_call.1} parent=15 // pred_check_branch
          %123 = sbr.rel (%p121) target = $region20
        $region19: #{tpu_custom_call.1} parent=15 // pred_region
          %s124 = sand.u32 %s56, 1
          %s125 = scalar_lea.sflag [#allocation6], %s124
          %s126 = sand.u32 %s56, 1
          %s127 = smul.addr %s126, 16
          %s128 = scalar_lea.vmem [#allocation5], %s127
          %s130 = ssub.s32 256, 256
          %131 = vsyncadd %s125, %s130
          %s132 = smul.addr %s32, 8
          %s133 = smul.addr %s31, 8
          %s134 = sadd.s32 %s132, %s133
          %s135 = smul.addr %s30, 24
          %s136 = sadd.s32 %s134, %s135
          %s137 = smul.addr %s136, 32
          %s138 = scalar_lea.hbm %s2, %s137
          %s140 = sshll.u32 %s128, 4
          %s141 = int_to_ptr.vmem [resolvable:$true] %s140
          %143 = dma.hbm_to_vmem [thread:$0]  %s138, 256, %s141, %s125
        $region20: #{tpu_custom_call.1} parent=15 // pred_fallthru
          _
      $region16: #{tpu_custom_call.1} parent=5 // pred_fallthru
        _
      %p144 = scmp.le.s32.totalorder 1, %s23
      %p145 = scmp.lt.s32.totalorder %s23, 7
      %p146 = pnand %p144, %p145
      %p147 = pneg %p146
      // Predicated region
      $region21: #{tpu_custom_call.1} parent=5 // pred_check
        _
      $region22: #{tpu_custom_call.1} parent=5 // pred_check_branch
        %149 = sbr.rel (%p146) target = $region24
      $region23: #{tpu_custom_call.1} parent=5 // pred_region
        %s150 = ssub.s32 %s23, 1
        %s151 = sand.u32 %s59, 1
        %s152 = scalar_lea.sflag [#allocation6], %s151
        %s153 = sand.u32 %s59, 1
        %s154 = smul.addr %s153, 16
        %s155 = scalar_lea.vmem [#allocation5], %s154
        // Predicated region
        $region25: #{tpu_custom_call.1} parent=23 // pred_check
          %p156 = pneg %p72
        $region26: #{tpu_custom_call.1} parent=23 // pred_check_branch
          %158 = sbr.rel (%p156) target = $region28
        $region27: #{tpu_custom_call.1} parent=23 // pred_region
          %159 = dma.done %s152, 256
        $region28: #{tpu_custom_call.1} parent=23 // pred_fallthru
          _
        %s160 = sand.u32 %s59, 1
        %s161 = scalar_lea.sflag [#allocation6], %s160
        %s162 = sand.u32 %s59, 1
        %s163 = smul.addr %s162, 16
        %s164 = scalar_lea.vmem [#allocation5], %s163
        %p165 = pneg %p72
        %p166 = pneg %p69
        %p167 = pneg %p102
        %p168 = pneg %p99
        %s169 = sand.u32 %s89, 1
        %s170 = scalar_lea.sflag [#allocation7], %s169
        %s171 = sand.u32 %s89, 1
        %s172 = smul.addr %s171, 16
        %s173 = scalar_lea.vmem [#allocation8], %s172
        %s174 = sld [smem:[#allocation3 + %s34]]
        %s175 = sld [smem:[#allocation4 + %s34]]
        %v176 = vld [vmem:[%s155] sm:$0xff]
        %v177 = vld [vmem:[%s155 + $0x8] sm:$0xff]
        %v178 = vstv %s174
        %v179 = vmul.f32 %v176, %v178
        %v180 = vmul.f32 %v177, %v178
        %v181 = vstv %s175
        %v182 = vadd.f32 %v179, %v181
        %v183 = vadd.f32 %v180, %v181
        %184 = vst [vmem:[%s173] sm:$0xff] %v182
        %185 = vst [vmem:[%s173 + $0x8] sm:$0xff] %v183
        %s186 = sand.u32 %s89, 1
        %s187 = scalar_lea.sflag [#allocation7], %s186
        %s188 = sand.u32 %s89, 1
        %s189 = smul.addr %s188, 16
        %s190 = scalar_lea.vmem [#allocation8], %s189
        // Predicated region
        $region29: #{tpu_custom_call.1} parent=23 // pred_check
          %p191 = pneg %p99
        $region30: #{tpu_custom_call.1} parent=23 // pred_check_branch
          %193 = sbr.rel (%p191) target = $region32
        $region31: #{tpu_custom_call.1} parent=23 // pred_region
          %s195 = ssub.s32 256, 256
          %196 = vsyncadd %s187, %s195
          %s197 = smul.addr %s35, 8
          %s198 = smul.addr %s34, 8
          %s199 = sadd.s32 %s197, %s198
          %s200 = smul.addr %s33, 24
          %s201 = sadd.s32 %s199, %s200
          %s202 = smul.addr %s201, 32
          %s203 = scalar_lea.hbm %s3, %s202
          %s205 = sshll.u32 %s190, 4
          %s206 = int_to_ptr.vmem [resolvable:$true] %s205
          %208 = dma.vmem_to_hbm [thread:$0]  %s206, 256, %s203, %s187
        $region32: #{tpu_custom_call.1} parent=23 // pred_fallthru
          _
      $region24: #{tpu_custom_call.1} parent=5 // pred_fallthru
        _
      %p209 = scmp.le.s32.totalorder 2, %s23
      // Predicated region
      $region33: #{tpu_custom_call.1} parent=5 // pred_check
        %p210 = pneg %p209
      $region34: #{tpu_custom_call.1} parent=5 // pred_check_branch
        %212 = sbr.rel (%p210) target = $region36
      $region35: #{tpu_custom_call.1} parent=5 // pred_region
        %s213 = ssub.s32 %s23, 2
        // Predicated region
        $region37: #{tpu_custom_call.1} parent=35 // pred_check
          %p214 = pneg %p105
        $region38: #{tpu_custom_call.1} parent=35 // pred_check_branch
          %216 = sbr.rel (%p214) target = $region40
        $region39: #{tpu_custom_call.1} parent=35 // pred_region
          %s217 = sand.u32 %s90, 1
          %s218 = scalar_lea.sflag [#allocation7], %s217
          %s219 = sand.u32 %s90, 1
          %s220 = smul.addr %s219, 16
          %s221 = scalar_lea.vmem [#allocation8], %s220
          %222 = dma.done %s218, 256
        $region40: #{tpu_custom_call.1} parent=35 // pred_fallthru
          _
      $region36: #{tpu_custom_call.1} parent=5 // pred_fallthru
        _
    $region6: #{tpu_custom_call.1} parent=1 // loop_footer
      %s27 = sadd.s32 1, %s23
    $region7: #{tpu_custom_call.1} parent=1 // loop_footer_branch
      %22 = sbr.rel target = $region3
    $region8: #{tpu_custom_call.1} parent=1 // loop_exit
      _
    %223 = vsyncpa [#allocation6], 1
    %s224 = scalar_lea.sflag [#allocation6], 1
    %225 = vsyncpa %s224, 1
    %226 = vsyncpa [#allocation7], 1
    %s227 = scalar_lea.sflag [#allocation7], 1
    %228 = vsyncpa %s227, 1

</llo_original>
